<compile_context>
chip_gen: v7x
topology: tpu7x:2x2x1
jax: 0.10.0
libtpu: 0.0.40
codegen_flags: <defaults>
</compile_context>

<pallas_src>
import jax
import jax.numpy as jnp
from jax import lax
from jax.experimental import pallas as pl
from jax.experimental.pallas import tpu as pltpu


def linear_kernel(x_ref, w_ref, o_ref):
    # x_ref: (tm, K) f32 row tile of X.
    # w_ref: (N, K) f32 full weight in nn.Linear layout (resident across grid).
    # Contract on K; the MXU takes the transposed RHS natively, f32 accumulate.
    o_ref[...] = lax.dot_general(
        x_ref[...],
        w_ref[...],
        dimension_numbers=(((1,), (1,)), ((), ())),
        preferred_element_type=jnp.float32,
    ).astype(o_ref.dtype)


def _round_up(x, m):
    return ((x + m - 1) // m) * m


def softmax_module_forward(x, weight, *, tm=1024):
    """Forward pass of the `Softmax` module: z = x @ weight.T (no bias).

    x:      (batch, in_features)        float32
    weight: (out_features, in_features) float32 (nn.Linear layout)
    returns (batch, out_features)       float32
    """
    batch, in_features = x.shape
    out_features, k = weight.shape
    assert k == in_features

    if batch == 0:
        # Empty grid guard.
        return jnp.zeros((0, out_features), dtype=jnp.float32)

    # Row tile:
    #  * big enough to amortize per-step pipeline overhead (default 1024),
    #  * clamped so the grid has >= 2 steps when the batch allows — on v7x
    #    the "parallel" grid axis is sharded across the 2 TensorCores,
    #  * always a multiple of 8 (sublane granularity); Pallas masks the
    #    partial tail block, so X is never padded in HBM.
    half_cover = _round_up(pl.cdiv(batch, 2), 8)
    tm_eff = max(8, min(tm, half_cover))
    grid = (pl.cdiv(batch, tm_eff),)

    out = pl.pallas_call(
        linear_kernel,
        out_shape=jax.ShapeDtypeStruct((batch, out_features), jnp.float32),
        grid_spec=pltpu.PrefetchScalarGridSpec(
            num_scalar_prefetch=0,
            grid=grid,
            in_specs=[
                # Row tile of X; full K (784) in one shot.
                pl.BlockSpec((tm_eff, in_features), lambda i: (i, 0)),
                # Full (small) weight, resident across all grid steps.
                pl.BlockSpec((out_features, in_features), lambda i: (0, 0)),
            ],
            # Last dim 10 equals the full array dim -> legal; masked vst is
            # cheap here (X reads dominate by ~80x).
            out_specs=pl.BlockSpec((tm_eff, out_features), lambda i: (i, 0)),
        ),
        compiler_params=pltpu.CompilerParams(
            # Batch axis is independent -> megacore-shardable on v7x.
            dimension_semantics=("parallel",),
        ),
    )(x, weight)

    return out


if __name__ == "__main__":
    input_data_size = 28 * 28  # 784, as in the module
    output_data_size = 10
    batch = 8

    key = jax.random.PRNGKey(0)
    kx, kw = jax.random.split(key)

    # Deterministic synthetic input (already flattened, like X.view(-1, 784)).
    x = jax.random.normal(kx, (batch, input_data_size), dtype=jnp.float32)

    # Weight in nn.Linear layout (out, in), PyTorch-default-like uniform init.
    bound = 1.0 / jnp.sqrt(jnp.float32(input_data_size))
    weight = jax.random.uniform(
        kw,
        (output_data_size, input_data_size),
        minval=-bound,
        maxval=bound,
        dtype=jnp.float32,
    )

    z = softmax_module_forward(x, weight)
    z = jax.block_until_ready(z)

    # Correctness check against plain JAX reference.
    z_ref = x @ weight.T
    assert z.shape == (batch, output_data_size)
    assert jnp.allclose(z, z_ref, atol=1e-4, rtol=1e-4)

    print("KERNEL_OK")
</pallas_src>

<mosaic_0001>
module attributes {stable_mosaic.version = 11 : i64} {
  func.func @linear_kernel(%arg0: i32, %arg1: memref<8x784xf32, #tpu.memory_space<vmem>>, %arg2: memref<10x784xf32, #tpu.memory_space<vmem>>, %arg3: memref<8x10xf32, #tpu.memory_space<vmem>>) attributes {dimension_semantics = [#tpu.dimension_semantics<parallel>], iteration_bounds = array<i64: 1>, scalar_prefetch = 0 : i64, scratch_operands = 0 : i64, tpu.core_type = #tpu.core_type<tc>, window_params = [{transform_indices = @transform_0, window_bounds = array<i64: 8, 784>}, {pipeline_mode = #tpu.pipeline_mode<synchronous>, transform_indices = @transform_1, window_bounds = array<i64: 10, 784>}, {transform_indices = @transform_2, window_bounds = array<i64: 8, 10>}]} {
    %c0 = arith.constant 0 : index
    %c0_0 = arith.constant 0 : index
    %0 = vector.load %arg1[%c0, %c0_0] : memref<8x784xf32, #tpu.memory_space<vmem>>, vector<8x784xf32>
    %c0_1 = arith.constant 0 : index
    %c0_2 = arith.constant 0 : index
    %1 = vector.load %arg2[%c0_1, %c0_2] : memref<10x784xf32, #tpu.memory_space<vmem>>, vector<10x784xf32>
    %cst = arith.constant dense<0.000000e+00> : vector<8x10xf32>
    %2 = tpu.matmul %0, %1, %cst {dimension_numbers = #tpu.dot_dimension_numbers<[1], [1], [0], [0], [0, 0, 1, 0], [], []>} : vector<8x784xf32>, vector<10x784xf32>, vector<8x10xf32> -> vector<8x10xf32>
    %c0_3 = arith.constant 0 : index
    %c0_4 = arith.constant 0 : index
    %3 = vector.load %arg3[%c0_3, %c0_4] : memref<8x10xf32, #tpu.memory_space<vmem>>, vector<8x10xf32>
    tpu.vector_store %arg3[%c0_3, %c0_4], %2 {strides = array<i32>} : memref<8x10xf32, #tpu.memory_space<vmem>>, vector<8x10xf32>,
    return
  }
  func.func @transform_0(%arg0: i32) -> (i32, i32) {
    %c0_i32 = arith.constant 0 : i32
    %c0_i32_0 = arith.constant 0 : i32
    return %arg0, %c0_i32 : i32, i32
  }
  func.func @transform_1(%arg0: i32) -> (i32, i32) {
    %c0_i32 = arith.constant 0 : i32
    %c0_i32_0 = arith.constant 0 : i32
    %c0_i32_1 = arith.constant 0 : i32
    return %c0_i32, %c0_i32_0 : i32, i32
  }
  func.func @transform_2(%arg0: i32) -> (i32, i32) {
    %c0_i32 = arith.constant 0 : i32
    %c0_i32_0 = arith.constant 0 : i32
    return %arg0, %c0_i32 : i32, i32
  }
}

</mosaic_0001>

<llo_original>
// kernel: tpu_custom_call.1
$region0: #{tpu_custom_call.1}
  #allocation0 [shape = 'u32[]', space=smem, size = 0x4, offset = 0x4, fixed_abs, tag = 'smem constant byte address 0x4 - core index']
  #allocation1 [shape = 'u32[144,128]{1,0:T(1,128)}', space=vmem, size = 0x12000, scoped, tag = 'internal scratch']
  %s0 = inlined_call_operand.hbm [shape: f32[8,784], index: 0, kind: input, shape index: {}]
  %s1 = inlined_call_operand.hbm [shape: f32[10,784], index: 1, kind: input, shape index: {}]
  %s2 = inlined_call_operand.hbm [shape: f32[8,10], index: 2, kind: output, shape index: {}]
  %s3 = sld [smem:[#allocation0]]
  $region26: #{tpu_custom_call.1} parent=0
    _
  %s5 = ssub.s32 1, %s3
  %s6 = scalar_select 0, %s5, %s3
  $region1: #{tpu_custom_call.1} parent=0
    #allocation2 [shape = 'u8[28672]{0}', space=vmem, size = 0x7000, scoped, tag = 'input window, operand 0, single buffered']
    #allocation3 [shape = 's32[1]{0}', space=sflag, size = 0x4, scoped, tag = 'scoped memory for tpu_custom_call.1']
    #allocation4 [shape = 's32[1]{0}', space=sflag, size = 0x4, scoped, tag = 'scoped memory for tpu_custom_call.1']
    #allocation5 [shape = 'u8[57344]{0}', space=vmem, size = 0xe000, scoped, tag = 'input window, operand 1, single buffered']
    #allocation6 [shape = 's32[1]{0}', space=sflag, size = 0x4, scoped, tag = 'scoped memory for tpu_custom_call.1']
    #allocation7 [shape = 'u8[4096]{0}', space=vmem, size = 0x1000, scoped, tag = 'output window, operand 0, single buffered']
    %7 = vsyncpa [#allocation3], 0
    %8 = vsyncpa [#allocation6], 0
    %9 = vsyncpa [#allocation4], 0
    // Predicated region
    $region2: #{tpu_custom_call.1} parent=1 // pred_check
      _
    $region3: #{tpu_custom_call.1} parent=1 // pred_check_branch
      %11 = sbr.rel (0) target = $region5
    $region4: #{tpu_custom_call.1} parent=1 // pred_region
      %s13 = ssub.s32 896, 896
      %14 = vsyncadd [#allocation3], %s13
      %s16 = sshll.u32 [#allocation2], 4
      %s17 = int_to_ptr.vmem [resolvable:$true] %s16
      %19 = dma.hbm_to_vmem [thread:$0]  %s0, 896, %s17, [#allocation3]
    $region5: #{tpu_custom_call.1} parent=1 // pred_fallthru
      _
    // Predicated region
    $region6: #{tpu_custom_call.1} parent=1 // pred_check
      _
    $region7: #{tpu_custom_call.1} parent=1 // pred_check_branch
      %21 = sbr.rel (0) target = $region9
    $region8: #{tpu_custom_call.1} parent=1 // pred_region
      %s23 = ssub.s32 1792, 1792
      %24 = vsyncadd [#allocation6], %s23
      %s25 = sshll.u32 [#allocation5], 4
      %s26 = int_to_ptr.vmem [resolvable:$true] %s25
      %31 = dma.hbm_to_vmem [thread:$0]  %s1, 1792, %s26, [#allocation6], 896, 896, 56
    $region9: #{tpu_custom_call.1} parent=1 // pred_fallthru
      _
    // Predicated region
    $region10: #{tpu_custom_call.1} parent=1 // pred_check
      _
    $region11: #{tpu_custom_call.1} parent=1 // pred_check_branch
      %33 = sbr.rel (0) target = $region13
    $region12: #{tpu_custom_call.1} parent=1 // pred_region
      %34 = dma.done [#allocation3], 896
    $region13: #{tpu_custom_call.1} parent=1 // pred_fallthru
      _
    // Predicated region
    $region14: #{tpu_custom_call.1} parent=1 // pred_check
      _
    $region15: #{tpu_custom_call.1} parent=1 // pred_check_branch
      %36 = sbr.rel (0) target = $region17
    $region16: #{tpu_custom_call.1} parent=1 // pred_region
      %37 = dma.done [#allocation6], 1792
    $region17: #{tpu_custom_call.1} parent=1 // pred_fallthru
      _
    %v38 = vld [vmem:[#allocation2] sm:$0xff]
    %v39 = vld [vmem:[#allocation2 + $0x8] sm:$0xff]
    %v40 = vld [vmem:[#allocation2 + $0x10] sm:$0xff]
    %v41 = vld [vmem:[#allocation2 + $0x18] sm:$0xff]
    %v42 = vld [vmem:[#allocation2 + $0x20] sm:$0xff]
    %v43 = vld [vmem:[#allocation2 + $0x28] sm:$0xff]
    %v44 = vld [vmem:[#allocation2 + $0x30] sm:$0xff]
    %v45 = vld [vmem:[#allocation5] sm:$0xff]
    %v46 = vld [vmem:[#allocation5 + $0x8] sm:$0xff]
    %v47 = vld [vmem:[#allocation5 + $0x10] sm:$0xff]
    %v48 = vld [vmem:[#allocation5 + $0x18] sm:$0xff]
    %v49 = vld [vmem:[#allocation5 + $0x20] sm:$0xff]
    %v50 = vld [vmem:[#allocation5 + $0x28] sm:$0xff]
    %v51 = vld [vmem:[#allocation5 + $0x30] sm:$0xff]
    %v52 = vld [vmem:[#allocation5 + $0x38] sm:$0x3]
    %v53 = vld [vmem:[#allocation5 + $0x40] sm:$0x3]
    %v54 = vld [vmem:[#allocation5 + $0x48] sm:$0x3]
    %v55 = vld [vmem:[#allocation5 + $0x50] sm:$0x3]
    %v56 = vld [vmem:[#allocation5 + $0x58] sm:$0x3]
    %v57 = vld [vmem:[#allocation5 + $0x60] sm:$0x3]
    %v58 = vld [vmem:[#allocation5 + $0x68] sm:$0x3]
    %vm59 = vcmask 130048
    %v61 = vsel %vm59, %v44, 0
    %v64 = vsel %vm59, %v51, 0
    %v67 = vsel %vm59, %v58, 0
    %69 = vmatprep.subr.mxu0 %v46
    %70 = vmatpush1.xpose.msra.mxu0 %v45
    %71 = vmatprep.subr.mxu0 %v53
    %72 = vmatpush1.xpose.msra.mxu0 %v52
    %73 = vmatprep.subr.mxu0 0.0
    %74 = vmatpush1.xpose.msra.mxu0 0.0
    %75 = vmatprep.subr.mxu0 0.0
    %76 = vmatpush1.xpose.msra.mxu0 0.0
    %77 = vmatprep.subr.mxu0 0.0
    %78 = vmatpush1.xpose.msra.mxu0 0.0
    %79 = vmatprep.subr.mxu0 0.0
    %80 = vmatpush1.xpose.msra.mxu0 0.0
    %81 = vmatprep.subr.mxu0 0.0
    %82 = vmatpush1.xpose.msra.mxu0 0.0
    %83 = vmatprep.subr.mxu0 0.0
    %84 = vmatpush1.xpose.msra.mxu0 0.0
    %85 = vmatprep.subr.mxu0 0.0
    %86 = vmatpush1.xpose.msra.mxu0 0.0
    %87 = vmatprep.subr.mxu0 0.0
    %88 = vmatpush1.xpose.msra.mxu0 0.0
    %89 = vmatprep.subr.mxu0 0.0
    %90 = vmatpush1.xpose.msra.mxu0 0.0
    %91 = vmatprep.subr.mxu0 0.0
    %92 = vmatpush1.xpose.msra.mxu0 0.0
    %93 = vmatprep.subr.mxu0 0.0
    %94 = vmatpush1.xpose.msra.mxu0 0.0
    %95 = vmatprep.subr.mxu0 0.0
    %96 = vmatpush1.xpose.msra.mxu0 0.0
    %97 = vmatprep.subr.mxu0 0.0
    %98 = vmatpush1.xpose.msra.mxu0 0.0
    %99 = vmatprep.subr.mxu0 0.0
    %100 = vmatpush1.xpose.msra.mxu0 0.0
    %101 = vmatprep.subr.mxu0 0.0
    %102 = vmatpush1.xpose.msra.mxu0 0.0
    %103 = vmatprep.subr.mxu0 0.0
    %104 = vmatpush1.xpose.msra.mxu0 0.0
    %105 = vmatprep.subr.mxu0 0.0
    %106 = vmatpush1.xpose.msra.mxu0 0.0
    %107 = vmatprep.subr.mxu0 0.0
    %108 = vmatpush1.xpose.msra.mxu0 0.0
    %109 = vmatprep.subr.mxu0 0.0
    %110 = vmatpush1.xpose.msra.mxu0 0.0
    %111 = vmatprep.subr.mxu0 0.0
    %112 = vmatpush1.xpose.msra.mxu0 0.0
    %113 = vmatprep.subr.mxu0 0.0
    %114 = vmatpush1.xpose.msra.mxu0 0.0
    %115 = vmatprep.subr.mxu0 0.0
    %116 = vmatpush1.xpose.msra.mxu0 0.0
    %117 = vmatprep.subr.mxu0 0.0
    %118 = vmatpush1.xpose.msra.mxu0 0.0
    %119 = vmatprep.subr.mxu0 0.0
    %120 = vmatpush1.xpose.msra.mxu0 0.0
    %121 = vmatprep.subr.mxu0 0.0
    %122 = vmatpush1.xpose.msra.mxu0 0.0
    %123 = vmatprep.subr.mxu0 0.0
    %124 = vmatpush1.xpose.msra.mxu0 0.0
    %125 = vmatprep.subr.mxu0 0.0
    %126 = vmatpush1.xpose.msra.mxu0 0.0
    %127 = vmatprep.subr.mxu0 0.0
    %128 = vmatpush1.xpose.msra.mxu0 0.0
    %129 = vmatprep.subr.mxu0 0.0
    %130 = vmatpush1.xpose.msra.mxu0 0.0
    %131 = vmatprep.subr.mxu0 0.0
    %132 = vmatpush1.xpose.msra.mxu0 0.0
    %133 = vmatprep.mubr.f32.mxu0 %v39
    %134 = vmatmul.mubr.f32.gmra.mrb[0].mxu0 %v38
    %v135 = vpop.f32.mrb[0].mxu0
    %v136 = vadd.f32 0.0, %v135
    %v137 = vpop.f32.mrb[0].mxu0
    %138 = vdwg.mxu0
    %139 = vmatprep.subr.mxu0 %v48
    %140 = vmatpush1.xpose.msra.mxu0 %v47
    %141 = vmatprep.subr.mxu0 %v55
    %142 = vmatpush1.xpose.msra.mxu0 %v54
    %143 = vmatprep.subr.mxu0 0.0
    %144 = vmatpush1.xpose.msra.mxu0 0.0
    %145 = vmatprep.subr.mxu0 0.0
    %146 = vmatpush1.xpose.msra.mxu0 0.0
    %147 = vmatprep.subr.mxu0 0.0
    %148 = vmatpush1.xpose.msra.mxu0 0.0
    %149 = vmatprep.subr.mxu0 0.0
    %150 = vmatpush1.xpose.msra.mxu0 0.0
    %151 = vmatprep.subr.mxu0 0.0
    %152 = vmatpush1.xpose.msra.mxu0 0.0
    %153 = vmatprep.subr.mxu0 0.0
    %154 = vmatpush1.xpose.msra.mxu0 0.0
    %155 = vmatprep.subr.mxu0 0.0
    %156 = vmatpush1.xpose.msra.mxu0 0.0
    %157 = vmatprep.subr.mxu0 0.0
    %158 = vmatpush1.xpose.msra.mxu0 0.0
    %159 = vmatprep.subr.mxu0 0.0
    %160 = vmatpush1.xpose.msra.mxu0 0.0
    %161 = vmatprep.subr.mxu0 0.0
    %162 = vmatpush1.xpose.msra.mxu0 0.0
    %163 = vmatprep.subr.mxu0 0.0
    %164 = vmatpush1.xpose.msra.mxu0 0.0
    %165 = vmatprep.subr.mxu0 0.0
    %166 = vmatpush1.xpose.msra.mxu0 0.0
    %167 = vmatprep.subr.mxu0 0.0
    %168 = vmatpush1.xpose.msra.mxu0 0.0
    %169 = vmatprep.subr.mxu0 0.0
    %170 = vmatpush1.xpose.msra.mxu0 0.0
    %171 = vmatprep.subr.mxu0 0.0
    %172 = vmatpush1.xpose.msra.mxu0 0.0
    %173 = vmatprep.subr.mxu0 0.0
    %174 = vmatpush1.xpose.msra.mxu0 0.0
    %175 = vmatprep.subr.mxu0 0.0
    %176 = vmatpush1.xpose.msra.mxu0 0.0
    %177 = vmatprep.subr.mxu0 0.0
    %178 = vmatpush1.xpose.msra.mxu0 0.0
    %179 = vmatprep.subr.mxu0 0.0
    %180 = vmatpush1.xpose.msra.mxu0 0.0
    %181 = vmatprep.subr.mxu0 0.0
    %182 = vmatpush1.xpose.msra.mxu0 0.0
    %183 = vmatprep.subr.mxu0 0.0
    %184 = vmatpush1.xpose.msra.mxu0 0.0
    %185 = vmatprep.subr.mxu0 0.0
    %186 = vmatpush1.xpose.msra.mxu0 0.0
    %187 = vmatprep.subr.mxu0 0.0
    %188 = vmatpush1.xpose.msra.mxu0 0.0
    %189 = vmatprep.subr.mxu0 0.0
    %190 = vmatpush1.xpose.msra.mxu0 0.0
    %191 = vmatprep.subr.mxu0 0.0
    %192 = vmatpush1.xpose.msra.mxu0 0.0
    %193 = vmatprep.subr.mxu0 0.0
    %194 = vmatpush1.xpose.msra.mxu0 0.0
    %195 = vmatprep.subr.mxu0 0.0
    %196 = vmatpush1.xpose.msra.mxu0 0.0
    %197 = vmatprep.subr.mxu0 0.0
    %198 = vmatpush1.xpose.msra.mxu0 0.0
    %199 = vmatprep.subr.mxu0 0.0
    %200 = vmatpush1.xpose.msra.mxu0 0.0
    %201 = vmatprep.subr.mxu0 0.0
    %202 = vmatpush1.xpose.msra.mxu0 0.0
    %203 = vmatprep.mubr.f32.mxu0 %v41
    %204 = vmatmul.mubr.f32.gmra.mrb[0].mxu0 %v40
    %v205 = vpop.f32.mrb[0].mxu0
    %v206 = vadd.f32 %v136, %v205
    %v207 = vpop.f32.mrb[0].mxu0
    %208 = vdwg.mxu0
    %209 = vmatprep.subr.mxu0 %v50
    %210 = vmatpush1.xpose.msra.mxu0 %v49
    %211 = vmatprep.subr.mxu0 %v57
    %212 = vmatpush1.xpose.msra.mxu0 %v56
    %213 = vmatprep.subr.mxu0 0.0
    %214 = vmatpush1.xpose.msra.mxu0 0.0
    %215 = vmatprep.subr.mxu0 0.0
    %216 = vmatpush1.xpose.msra.mxu0 0.0
    %217 = vmatprep.subr.mxu0 0.0
    %218 = vmatpush1.xpose.msra.mxu0 0.0
    %219 = vmatprep.subr.mxu0 0.0
    %220 = vmatpush1.xpose.msra.mxu0 0.0
    %221 = vmatprep.subr.mxu0 0.0
    %222 = vmatpush1.xpose.msra.mxu0 0.0
    %223 = vmatprep.subr.mxu0 0.0
    %224 = vmatpush1.xpose.msra.mxu0 0.0
    %225 = vmatprep.subr.mxu0 0.0
    %226 = vmatpush1.xpose.msra.mxu0 0.0
    %227 = vmatprep.subr.mxu0 0.0
    %228 = vmatpush1.xpose.msra.mxu0 0.0
    %229 = vmatprep.subr.mxu0 0.0
    %230 = vmatpush1.xpose.msra.mxu0 0.0
    %231 = vmatprep.subr.mxu0 0.0
    %232 = vmatpush1.xpose.msra.mxu0 0.0
    %233 = vmatprep.subr.mxu0 0.0
    %234 = vmatpush1.xpose.msra.mxu0 0.0
    %235 = vmatprep.subr.mxu0 0.0
    %236 = vmatpush1.xpose.msra.mxu0 0.0
    %237 = vmatprep.subr.mxu0 0.0
    %238 = vmatpush1.xpose.msra.mxu0 0.0
    %239 = vmatprep.subr.mxu0 0.0
    %240 = vmatpush1.xpose.msra.mxu0 0.0
    %241 = vmatprep.subr.mxu0 0.0
    %242 = vmatpush1.xpose.msra.mxu0 0.0
    %243 = vmatprep.subr.mxu0 0.0
    %244 = vmatpush1.xpose.msra.mxu0 0.0
    %245 = vmatprep.subr.mxu0 0.0
    %246 = vmatpush1.xpose.msra.mxu0 0.0
    %247 = vmatprep.subr.mxu0 0.0
    %248 = vmatpush1.xpose.msra.mxu0 0.0
    %249 = vmatprep.subr.mxu0 0.0
    %250 = vmatpush1.xpose.msra.mxu0 0.0
    %251 = vmatprep.subr.mxu0 0.0
    %252 = vmatpush1.xpose.msra.mxu0 0.0
    %253 = vmatprep.subr.mxu0 0.0
    %254 = vmatpush1.xpose.msra.mxu0 0.0
    %255 = vmatprep.subr.mxu0 0.0
    %256 = vmatpush1.xpose.msra.mxu0 0.0
    %257 = vmatprep.subr.mxu0 0.0
    %258 = vmatpush1.xpose.msra.mxu0 0.0
    %259 = vmatprep.subr.mxu0 0.0
    %260 = vmatpush1.xpose.msra.mxu0 0.0
    %261 = vmatprep.subr.mxu0 0.0
    %262 = vmatpush1.xpose.msra.mxu0 0.0
    %263 = vmatprep.subr.mxu0 0.0
    %264 = vmatpush1.xpose.msra.mxu0 0.0
    %265 = vmatprep.subr.mxu0 0.0
    %266 = vmatpush1.xpose.msra.mxu0 0.0
    %267 = vmatprep.subr.mxu0 0.0
    %268 = vmatpush1.xpose.msra.mxu0 0.0
    %269 = vmatprep.subr.mxu0 0.0
    %270 = vmatpush1.xpose.msra.mxu0 0.0
    %271 = vmatprep.subr.mxu0 0.0
    %272 = vmatpush1.xpose.msra.mxu0 0.0
    %273 = vmatprep.mubr.f32.mxu0 %v43
    %274 = vmatmul.mubr.f32.gmra.mrb[0].mxu0 %v42
    %v275 = vpop.f32.mrb[0].mxu0
    %v276 = vadd.f32 %v206, %v275
    %v277 = vpop.f32.mrb[0].mxu0
    %278 = vdwg.mxu0
    %279 = vmatprep.subr.mxu0 0.0
    %280 = vmatpush1.xpose.msra.mxu0 %v64
    %281 = vmatprep.subr.mxu0 0.0
    %282 = vmatpush1.xpose.msra.mxu0 %v67
    %283 = vmatprep.subr.mxu0 0.0
    %284 = vmatpush1.xpose.msra.mxu0 0.0
    %285 = vmatprep.subr.mxu0 0.0
    %286 = vmatpush1.xpose.msra.mxu0 0.0
    %287 = vmatprep.subr.mxu0 0.0
    %288 = vmatpush1.xpose.msra.mxu0 0.0
    %289 = vmatprep.subr.mxu0 0.0
    %290 = vmatpush1.xpose.msra.mxu0 0.0
    %291 = vmatprep.subr.mxu0 0.0
    %292 = vmatpush1.xpose.msra.mxu0 0.0
    %293 = vmatprep.subr.mxu0 0.0
    %294 = vmatpush1.xpose.msra.mxu0 0.0
    %295 = vmatprep.subr.mxu0 0.0
    %296 = vmatpush1.xpose.msra.mxu0 0.0
    %297 = vmatprep.subr.mxu0 0.0
    %298 = vmatpush1.xpose.msra.mxu0 0.0
    %299 = vmatprep.subr.mxu0 0.0
    %300 = vmatpush1.xpose.msra.mxu0 0.0
    %301 = vmatprep.subr.mxu0 0.0
    %302 = vmatpush1.xpose.msra.mxu0 0.0
    %303 = vmatprep.subr.mxu0 0.0
    %304 = vmatpush1.xpose.msra.mxu0 0.0
    %305 = vmatprep.subr.mxu0 0.0
    %306 = vmatpush1.xpose.msra.mxu0 0.0
    %307 = vmatprep.subr.mxu0 0.0
    %308 = vmatpush1.xpose.msra.mxu0 0.0
    %309 = vmatprep.subr.mxu0 0.0
    %310 = vmatpush1.xpose.msra.mxu0 0.0
    %311 = vmatprep.subr.mxu0 0.0
    %312 = vmatpush1.xpose.msra.mxu0 0.0
    %313 = vmatprep.subr.mxu0 0.0
    %314 = vmatpush1.xpose.msra.mxu0 0.0
    %315 = vmatprep.subr.mxu0 0.0
    %316 = vmatpush1.xpose.msra.mxu0 0.0
    %317 = vmatprep.subr.mxu0 0.0
    %318 = vmatpush1.xpose.msra.mxu0 0.0
    %319 = vmatprep.subr.mxu0 0.0
    %320 = vmatpush1.xpose.msra.mxu0 0.0
    %321 = vmatprep.subr.mxu0 0.0
    %322 = vmatpush1.xpose.msra.mxu0 0.0
    %323 = vmatprep.subr.mxu0 0.0
    %324 = vmatpush1.xpose.msra.mxu0 0.0
    %325 = vmatprep.subr.mxu0 0.0
    %326 = vmatpush1.xpose.msra.mxu0 0.0
    %327 = vmatprep.subr.mxu0 0.0
    %328 = vmatpush1.xpose.msra.mxu0 0.0
    %329 = vmatprep.subr.mxu0 0.0
    %330 = vmatpush1.xpose.msra.mxu0 0.0
    %331 = vmatprep.subr.mxu0 0.0
    %332 = vmatpush1.xpose.msra.mxu0 0.0
    %333 = vmatprep.subr.mxu0 0.0
    %334 = vmatpush1.xpose.msra.mxu0 0.0
    %335 = vmatprep.subr.mxu0 0.0
    %336 = vmatpush1.xpose.msra.mxu0 0.0
    %337 = vmatprep.subr.mxu0 0.0
    %338 = vmatpush1.xpose.msra.mxu0 0.0
    %339 = vmatprep.subr.mxu0 0.0
    %340 = vmatpush1.xpose.msra.mxu0 0.0
    %341 = vmatprep.subr.mxu0 0.0
    %342 = vmatpush1.xpose.msra.mxu0 0.0
    %343 = vmatprep.mubr.f32.mxu0 0.0
    %344 = vmatmul.mubr.f32.gmra.mrb[0].mxu0 %v61
    %v345 = vpop.f32.mrb[0].mxu0
    %v346 = vadd.f32 %v276, %v345
    %v347 = vpop.f32.mrb[0].mxu0
    %348 = vdwg.mxu0
    %vm349 = vcmask 80896
    %350 = vst.msk [vmem:[#allocation7] sm:$0xff] %vm349, %v346
    // Predicated region
    $region18: #{tpu_custom_call.1} parent=1 // pred_check
      _
    $region19: #{tpu_custom_call.1} parent=1 // pred_check_branch
      %352 = sbr.rel (0) target = $region21
    $region20: #{tpu_custom_call.1} parent=1 // pred_region
      %s354 = ssub.s32 128, 128
      %355 = vsyncadd [#allocation4], %s354
      %s357 = sshll.u32 [#allocation7], 4
      %s358 = int_to_ptr.vmem [resolvable:$true] %s357
      %360 = dma.vmem_to_hbm [thread:$0]  %s358, 128, %s2, [#allocation4]
    $region21: #{tpu_custom_call.1} parent=1 // pred_fallthru
      _
    // Predicated region
    $region22: #{tpu_custom_call.1} parent=1 // pred_check
      _
    $region23: #{tpu_custom_call.1} parent=1 // pred_check_branch
      %362 = sbr.rel (0) target = $region25
    $region24: #{tpu_custom_call.1} parent=1 // pred_region
      %363 = dma.done [#allocation4], 128
    $region25: #{tpu_custom_call.1} parent=1 // pred_fallthru
      _
    %364 = vsyncpa [#allocation3], 1
    %365 = vsyncpa [#allocation6], 1
    %366 = vsyncpa [#allocation4], 1

</llo_original>
